<compile_context>
chip_gen: v7x
topology: tpu7x:2x2x1
jax: 0.10.0
libtpu: 0.0.40
codegen_flags: <defaults>
</compile_context>

<pallas_src>
import functools

import numpy as np
import jax
import jax.numpy as jnp
from jax import lax
from jax.experimental import pallas as pl
from jax.experimental.pallas import tpu as pltpu


def fused_convblock_kernel(x_ref, bw1_ref, b1_ref, bw2_ref, b2_ref, o_ref,
                           mid_ref):
    """Nb batch elements per step, both convs + LeakyReLU fused.

    x_ref   : (Nb, H+2, W*Cinp)   f32 input, H zero-padded by 1, (W,Cinp) on lanes
    bw1_ref : (3, W*Cinp, W*Cout) bf16 banded conv1 weight (one slab per dy tap)
    b1_ref  : (1, W*Cout)         f32 conv1 bias tiled over w_out
    bw2_ref : (3, W*Cout, W*Cout) bf16 banded conv2 weight
    b2_ref  : (1, W*Cout)         f32 conv2 bias
    o_ref   : (Nb, H, W*Cout)     lane-dense output
    mid_ref : VMEM (Nb, H+2, W*Cout) bf16 scratch: conv1 activation + zero H halo
    """
    nb, hp2, _ = x_ref.shape
    h = hp2 - 2
    wc_out = o_ref.shape[-1]

    def conv3x3(src_ref, w_ref, b_row, cast_bf16):
        # Three dy-tap matmuls accumulated in f32; M = Nb*H rows.
        acc = None
        for dy in range(3):                                   # static unroll
            lhs = src_ref[:, dy:dy + h, :]                    # (Nb, H, K)
            lhs = lhs.reshape(nb * h, src_ref.shape[-1])
            if cast_bf16:
                lhs = lhs.astype(jnp.bfloat16)
            part = jnp.dot(lhs, w_ref[dy],
                           preferred_element_type=jnp.float32)
            acc = part if acc is None else acc + part
        v = acc + b_row                                       # f32 epilogue
        return jnp.where(v >= 0.0, v, 0.2 * v)                # LeakyReLU(0.2)

    # ---- conv1 + LeakyReLU (f32 input cast to bf16 per slab) ----------------
    y1 = conv3x3(x_ref, bw1_ref, b1_ref[...], cast_bf16=True)  # (Nb*H, W*Cout)

    # ---- intermediate stays in VMEM (bf16) with a zero H halo ---------------
    # Only the two halo rows are zeroed; rows 1..H are overwritten every step.
    mid_ref[:, 0:1, :] = jnp.zeros((nb, 1, wc_out), mid_ref.dtype)
    mid_ref[:, h + 1:h + 2, :] = jnp.zeros((nb, 1, wc_out), mid_ref.dtype)
    mid_ref[:, 1:h + 1, :] = y1.reshape(nb, h, wc_out).astype(mid_ref.dtype)

    # ---- conv2 + LeakyReLU (operands already bf16) ---------------------------
    y2 = conv3x3(mid_ref, bw2_ref, b2_ref[...], cast_bf16=False)

    o_ref[...] = y2.reshape(nb, h, wc_out).astype(o_ref.dtype)


def _banded_3x3_weight(w_hwio, W, cin_pad):
    """Fold the 3 dx taps and the W axis into the matmul contraction.

    Returns BW with BW[dy, wi*Cinp + ci, wo*Cout + co] = w[dy, dx, ci, co]
    where wi = wo + dx - 1; taps falling outside [0, W) are dropped, which is
    exactly SAME zero padding along W.  Pure gather/select -> exact.
    """
    kh, kw, cin, cout = w_hwio.shape                     # 3, 3, Cin, Cout
    if cin_pad > cin:
        w_hwio = jnp.pad(w_hwio, ((0, 0), (0, 0), (0, cin_pad - cin), (0, 0)))
    wi = np.arange(W)[:, None]                           # input column
    wo = np.arange(W)[None, :]                           # output column
    dx = wi - wo + (kw // 2)                             # (W, W) tap index
    valid = (dx >= 0) & (dx < kw)
    dx_c = np.clip(dx, 0, kw - 1)
    g = jnp.take(w_hwio, jnp.asarray(dx_c), axis=1)      # (kh, Wi, Wo, ci, co)
    g = jnp.where(jnp.asarray(valid)[None, :, :, None, None], g, 0.0)
    g = jnp.transpose(g, (0, 1, 3, 2, 4))                # (kh, Wi, ci, Wo, co)
    return g.reshape(kh, W * cin_pad, W * cout)


@functools.partial(jax.jit, static_argnames=("batch_block",))
def convblock_forward(x_nchw, w1, b1, w2, b2, batch_block=None):
    """Matches Convblock.forward: conv->LReLU->conv->LReLU, NCHW in / NCHW out."""
    N, Cin, H, W = x_nchw.shape
    Cout = w1.shape[-1]

    # Lane-dense conv1 LHS: pad Cin so W*Cinp is a multiple of 128 when cheap.
    q = 128 // W if 128 % W == 0 else 8
    Cinp = int(np.ceil(Cin / q) * q)

    # Batch block: raise MXU M (= Nb*H) while keeping >= 2 grid steps when
    # N >= 2 so v7x megacore can shard the "parallel" grid axis.
    if batch_block is None:
        nb = max(1, min(N, max(1, 256 // H)))
        while nb > 1 and pl.cdiv(N, nb) < 2:
            nb //= 2
    else:
        nb = int(batch_block)
    nb = max(1, min(nb, N))
    num_blocks = pl.cdiv(N, nb)
    n_pad = num_blocks * nb

    x = jnp.transpose(x_nchw, (0, 2, 3, 1))                   # NCHW -> NHWC
    x = jnp.pad(x, ((0, n_pad - N), (1, 1), (0, 0), (0, Cinp - Cin)))
    x2d = x.reshape(n_pad, H + 2, W * Cinp)                   # lane-dense slab

    bw1 = _banded_3x3_weight(w1, W, Cinp).astype(jnp.bfloat16)  # (3, W*Cinp, W*Cout)
    bw2 = _banded_3x3_weight(w2, W, Cout).astype(jnp.bfloat16)  # (3, W*Cout, W*Cout)
    b1r = jnp.tile(b1, W).reshape(1, W * Cout).astype(jnp.float32)
    b2r = jnp.tile(b2, W).reshape(1, W * Cout).astype(jnp.float32)

    out = pl.pallas_call(
        fused_convblock_kernel,
        out_shape=jax.ShapeDtypeStruct((n_pad, H, W * Cout), x_nchw.dtype),
        grid_spec=pltpu.PrefetchScalarGridSpec(
            num_scalar_prefetch=0,
            grid=(num_blocks,),
            in_specs=[
                pl.BlockSpec((nb, H + 2, W * Cinp), lambda n: (n, 0, 0)),
                pl.BlockSpec((3, W * Cinp, W * Cout), lambda n: (0, 0, 0)),
                pl.BlockSpec((1, W * Cout), lambda n: (0, 0)),
                pl.BlockSpec((3, W * Cout, W * Cout), lambda n: (0, 0, 0)),
                pl.BlockSpec((1, W * Cout), lambda n: (0, 0)),
            ],
            out_specs=pl.BlockSpec((nb, H, W * Cout), lambda n: (n, 0, 0)),
            scratch_shapes=[pltpu.VMEM((nb, H + 2, W * Cout), jnp.bfloat16)],
        ),
        compiler_params=pltpu.CompilerParams(
            dimension_semantics=("parallel",),        # megacore over batch blocks
            vmem_limit_bytes=32 * 1024 * 1024,
        ),
    )(x2d, bw1, b1r, bw2, b2r)

    out = out[:N].reshape(N, H, W, Cout)                      # unpack lanes
    return jnp.transpose(out, (0, 3, 1, 2))                   # NHWC -> NCHW


def init_convblock_params(key, in_channels, out_channels):
    """Deterministic synthetic params, HWIO layout (3, 3, Cin, Cout)."""
    k1, k2, k3, k4 = jax.random.split(key, 4)
    s1 = 1.0 / jnp.sqrt(in_channels * 9.0)
    s2 = 1.0 / jnp.sqrt(out_channels * 9.0)
    w1 = jax.random.uniform(k1, (3, 3, in_channels, out_channels),
                            jnp.float32, -s1, s1)
    b1 = jax.random.uniform(k2, (out_channels,), jnp.float32, -s1, s1)
    w2 = jax.random.uniform(k3, (3, 3, out_channels, out_channels),
                            jnp.float32, -s2, s2)
    b2 = jax.random.uniform(k4, (out_channels,), jnp.float32, -s2, s2)
    return w1, b1, w2, b2


def _reference(x_nchw, w1, b1, w2, b2):
    """Pure-JAX f32 reference (XLA conv) for correctness checking."""
    x = jnp.transpose(x_nchw, (0, 2, 3, 1))
    dn = ("NHWC", "HWIO", "NHWC")
    y = lax.conv_general_dilated(x, w1, (1, 1), "SAME",
                                 dimension_numbers=dn) + b1
    y = jnp.where(y >= 0, y, 0.2 * y)
    y = lax.conv_general_dilated(y, w2, (1, 1), "SAME",
                                 dimension_numbers=dn) + b2
    y = jnp.where(y >= 0, y, 0.2 * y)
    return jnp.transpose(y, (0, 3, 1, 2))


if __name__ == "__main__":
    key = jax.random.PRNGKey(0)
    kx, kp = jax.random.split(key)

    N, Cin, Cout, H, W = 2, 4, 8, 16, 16          # W*Cout = 128 -> lane-dense
    x = jax.random.normal(kx, (N, Cin, H, W), jnp.float32)   # NCHW like PyTorch
    w1, b1, w2, b2 = init_convblock_params(kp, Cin, Cout)

    out = jax.block_until_ready(convblock_forward(x, w1, b1, w2, b2))
    ref = jax.block_until_ready(_reference(x, w1, b1, w2, b2))
    assert out.shape == (N, Cout, H, W)
    # bf16 MXU operands vs f32 XLA reference -> relaxed tolerance.
    assert jnp.allclose(out, ref, atol=4e-2, rtol=4e-2), (
        "mismatch vs reference: max abs err = "
        + str(float(jnp.max(jnp.abs(out - ref)))))

    # Exercise the batch-blocked path (Nb > 1 -> larger MXU M dimension).
    x8 = jax.random.normal(kx, (8, Cin, H, W), jnp.float32)
    out8 = jax.block_until_ready(convblock_forward(x8, w1, b1, w2, b2))
    ref8 = jax.block_until_ready(_reference(x8, w1, b1, w2, b2))
    assert jnp.allclose(out8, ref8, atol=4e-2, rtol=4e-2), (
        "batch-blocked mismatch: max abs err = "
        + str(float(jnp.max(jnp.abs(out8 - ref8)))))

    print("KERNEL_OK")
</pallas_src>

<mosaic_0001>
module attributes {stable_mosaic.version = 11 : i64} {
  func.func @fused_convblock_kernel(%arg0: i32, %arg1: memref<1x18x128xf32, #tpu.memory_space<vmem>>, %arg2: memref<3x128x128xbf16, #tpu.memory_space<vmem>>, %arg3: memref<1x128xf32, #tpu.memory_space<vmem>>, %arg4: memref<3x128x128xbf16, #tpu.memory_space<vmem>>, %arg5: memref<1x128xf32, #tpu.memory_space<vmem>>, %arg6: memref<1x16x128xf32, #tpu.memory_space<vmem>>, %arg7: memref<1x18x128xbf16, #tpu.memory_space<vmem>>) attributes {dimension_semantics = [#tpu.dimension_semantics<parallel>], iteration_bounds = array<i64: 2>, scalar_prefetch = 0 : i64, scratch_operands = 1 : i64, tpu.core_type = #tpu.core_type<tc>, window_params = [{transform_indices = @transform_0, window_bounds = array<i64: 1, 18, 128>}, {pipeline_mode = #tpu.pipeline_mode<synchronous>, transform_indices = @transform_1, window_bounds = array<i64: 3, 128, 128>}, {pipeline_mode = #tpu.pipeline_mode<synchronous>, transform_indices = @transform_2, window_bounds = array<i64: 1, 128>}, {pipeline_mode = #tpu.pipeline_mode<synchronous>, transform_indices = @transform_3, window_bounds = array<i64: 3, 128, 128>}, {pipeline_mode = #tpu.pipeline_mode<synchronous>, transform_indices = @transform_4, window_bounds = array<i64: 1, 128>}, {transform_indices = @transform_5, window_bounds = array<i64: 1, 16, 128>}]} {
    %c0 = arith.constant 0 : index
    %c0_0 = arith.constant 0 : index
    %0 = vector.load %arg3[%c0, %c0_0] : memref<1x128xf32, #tpu.memory_space<vmem>>, vector<1x128xf32>
    %c0_1 = arith.constant 0 : index
    %c0_2 = arith.constant 0 : index
    %c0_3 = arith.constant 0 : index
    %1 = vector.load %arg1[%c0_1, %c0_2, %c0_3] : memref<1x18x128xf32, #tpu.memory_space<vmem>>, vector<1x16x128xf32>
    %2 = vector.shape_cast %1 : vector<1x16x128xf32> to vector<16x128xf32>
    %3 = arith.truncf %2 : vector<16x128xf32> to vector<16x128xbf16>
    %c0_4 = arith.constant 0 : index
    %c0_5 = arith.constant 0 : index
    %c0_6 = arith.constant 0 : index
    %4 = vector.load %arg2[%c0_4, %c0_5, %c0_6] : memref<3x128x128xbf16, #tpu.memory_space<vmem>>, vector<1x128x128xbf16>
    %5 = vector.shape_cast %4 : vector<1x128x128xbf16> to vector<128x128xbf16>
    %cst = arith.constant dense<0.000000e+00> : vector<16x128xf32>
    %6 = tpu.matmul %3, %5, %cst {dimension_numbers = #tpu.dot_dimension_numbers<[1], [0], [0], [1], [0, 0, 1, 1], [], []>} : vector<16x128xbf16>, vector<128x128xbf16>, vector<16x128xf32> -> vector<16x128xf32>
    %c0_7 = arith.constant 0 : index
    %c1 = arith.constant 1 : index
    %c0_8 = arith.constant 0 : index
    %7 = vector.load %arg1[%c0_7, %c1, %c0_8] : memref<1x18x128xf32, #tpu.memory_space<vmem>>, vector<1x16x128xf32>
    %8 = vector.shape_cast %7 : vector<1x16x128xf32> to vector<16x128xf32>
    %9 = arith.truncf %8 : vector<16x128xf32> to vector<16x128xbf16>
    %c1_9 = arith.constant 1 : index
    %c0_10 = arith.constant 0 : index
    %c0_11 = arith.constant 0 : index
    %10 = vector.load %arg2[%c1_9, %c0_10, %c0_11] : memref<3x128x128xbf16, #tpu.memory_space<vmem>>, vector<1x128x128xbf16>
    %11 = vector.shape_cast %10 : vector<1x128x128xbf16> to vector<128x128xbf16>
    %cst_12 = arith.constant dense<0.000000e+00> : vector<16x128xf32>
    %12 = tpu.matmul %9, %11, %cst_12 {dimension_numbers = #tpu.dot_dimension_numbers<[1], [0], [0], [1], [0, 0, 1, 1], [], []>} : vector<16x128xbf16>, vector<128x128xbf16>, vector<16x128xf32> -> vector<16x128xf32>
    %13 = arith.addf %6, %12 : vector<16x128xf32>
    %c0_13 = arith.constant 0 : index
    %c2 = arith.constant 2 : index
    %c0_14 = arith.constant 0 : index
    %14 = vector.load %arg1[%c0_13, %c2, %c0_14] : memref<1x18x128xf32, #tpu.memory_space<vmem>>, vector<1x16x128xf32>
    %15 = vector.shape_cast %14 : vector<1x16x128xf32> to vector<16x128xf32>
    %16 = arith.truncf %15 : vector<16x128xf32> to vector<16x128xbf16>
    %c2_15 = arith.constant 2 : index
    %c0_16 = arith.constant 0 : index
    %c0_17 = arith.constant 0 : index
    %17 = vector.load %arg2[%c2_15, %c0_16, %c0_17] : memref<3x128x128xbf16, #tpu.memory_space<vmem>>, vector<1x128x128xbf16>
    %18 = vector.shape_cast %17 : vector<1x128x128xbf16> to vector<128x128xbf16>
    %cst_18 = arith.constant dense<0.000000e+00> : vector<16x128xf32>
    %19 = tpu.matmul %16, %18, %cst_18 {dimension_numbers = #tpu.dot_dimension_numbers<[1], [0], [0], [1], [0, 0, 1, 1], [], []>} : vector<16x128xbf16>, vector<128x128xbf16>, vector<16x128xf32> -> vector<16x128xf32>
    %20 = arith.addf %13, %19 : vector<16x128xf32>
    %21 = vector.broadcast %0 : vector<1x128xf32> to vector<16x128xf32>
    %22 = arith.addf %20, %21 : vector<16x128xf32>
    %cst_19 = arith.constant 0.000000e+00 : f32
    %23 = vector.broadcast %cst_19 : f32 to vector<16x128xf32>
    %24 = arith.cmpf oge, %22, %23 : vector<16x128xf32>
    %cst_20 = arith.constant 2.000000e-01 : f32
    %25 = vector.broadcast %cst_20 : f32 to vector<16x128xf32>
    %26 = arith.mulf %25, %22 : vector<16x128xf32>
    %27 = arith.select %24, %22, %26 : vector<16x128xi1>, vector<16x128xf32>
    %cst_21 = arith.constant 0.000000e+00 : bf16
    %28 = vector.broadcast %cst_21 : bf16 to vector<1x1x128xbf16>
    %c0_22 = arith.constant 0 : index
    %c0_23 = arith.constant 0 : index
    %c0_24 = arith.constant 0 : index
    %29 = vector.load %arg7[%c0_22, %c0_23, %c0_24] : memref<1x18x128xbf16, #tpu.memory_space<vmem>>, vector<1x1x128xbf16>
    tpu.vector_store %arg7[%c0_22, %c0_23, %c0_24], %28 {strides = array<i32>} : memref<1x18x128xbf16, #tpu.memory_space<vmem>>, vector<1x1x128xbf16>,
    %cst_25 = arith.constant 0.000000e+00 : bf16
    %30 = vector.broadcast %cst_25 : bf16 to vector<1x1x128xbf16>
    %c0_26 = arith.constant 0 : index
    %c17 = arith.constant 17 : index
    %c0_27 = arith.constant 0 : index
    %31 = vector.load %arg7[%c0_26, %c17, %c0_27] : memref<1x18x128xbf16, #tpu.memory_space<vmem>>, vector<1x1x128xbf16>
    tpu.vector_store %arg7[%c0_26, %c17, %c0_27], %30 {strides = array<i32>} : memref<1x18x128xbf16, #tpu.memory_space<vmem>>, vector<1x1x128xbf16>,
    %32 = vector.shape_cast %27 : vector<16x128xf32> to vector<1x16x128xf32>
    %33 = arith.truncf %32 : vector<1x16x128xf32> to vector<1x16x128xbf16>
    %c0_28 = arith.constant 0 : index
    %c1_29 = arith.constant 1 : index
    %c0_30 = arith.constant 0 : index
    %34 = vector.load %arg7[%c0_28, %c1_29, %c0_30] : memref<1x18x128xbf16, #tpu.memory_space<vmem>>, vector<1x16x128xbf16>
    tpu.vector_store %arg7[%c0_28, %c1_29, %c0_30], %33 {strides = array<i32>} : memref<1x18x128xbf16, #tpu.memory_space<vmem>>, vector<1x16x128xbf16>,
    %c0_31 = arith.constant 0 : index
    %c0_32 = arith.constant 0 : index
    %35 = vector.load %arg5[%c0_31, %c0_32] : memref<1x128xf32, #tpu.memory_space<vmem>>, vector<1x128xf32>
    %c0_33 = arith.constant 0 : index
    %c0_34 = arith.constant 0 : index
    %c0_35 = arith.constant 0 : index
    %36 = vector.load %arg7[%c0_33, %c0_34, %c0_35] : memref<1x18x128xbf16, #tpu.memory_space<vmem>>, vector<1x16x128xbf16>
    %37 = vector.shape_cast %36 : vector<1x16x128xbf16> to vector<16x128xbf16>
    %c0_36 = arith.constant 0 : index
    %c0_37 = arith.constant 0 : index
    %c0_38 = arith.constant 0 : index
    %38 = vector.load %arg4[%c0_36, %c0_37, %c0_38] : memref<3x128x128xbf16, #tpu.memory_space<vmem>>, vector<1x128x128xbf16>
    %39 = vector.shape_cast %38 : vector<1x128x128xbf16> to vector<128x128xbf16>
    %cst_39 = arith.constant dense<0.000000e+00> : vector<16x128xf32>
    %40 = tpu.matmul %37, %39, %cst_39 {dimension_numbers = #tpu.dot_dimension_numbers<[1], [0], [0], [1], [0, 0, 1, 1], [], []>} : vector<16x128xbf16>, vector<128x128xbf16>, vector<16x128xf32> -> vector<16x128xf32>
    %c0_40 = arith.constant 0 : index
    %c1_41 = arith.constant 1 : index
    %c0_42 = arith.constant 0 : index
    %41 = vector.load %arg7[%c0_40, %c1_41, %c0_42] : memref<1x18x128xbf16, #tpu.memory_space<vmem>>, vector<1x16x128xbf16>
    %42 = vector.shape_cast %41 : vector<1x16x128xbf16> to vector<16x128xbf16>
    %c1_43 = arith.constant 1 : index
    %c0_44 = arith.constant 0 : index
    %c0_45 = arith.constant 0 : index
    %43 = vector.load %arg4[%c1_43, %c0_44, %c0_45] : memref<3x128x128xbf16, #tpu.memory_space<vmem>>, vector<1x128x128xbf16>
    %44 = vector.shape_cast %43 : vector<1x128x128xbf16> to vector<128x128xbf16>
    %cst_46 = arith.constant dense<0.000000e+00> : vector<16x128xf32>
    %45 = tpu.matmul %42, %44, %cst_46 {dimension_numbers = #tpu.dot_dimension_numbers<[1], [0], [0], [1], [0, 0, 1, 1], [], []>} : vector<16x128xbf16>, vector<128x128xbf16>, vector<16x128xf32> -> vector<16x128xf32>
    %46 = arith.addf %40, %45 : vector<16x128xf32>
    %c0_47 = arith.constant 0 : index
    %c2_48 = arith.constant 2 : index
    %c0_49 = arith.constant 0 : index
    %47 = vector.load %arg7[%c0_47, %c2_48, %c0_49] : memref<1x18x128xbf16, #tpu.memory_space<vmem>>, vector<1x16x128xbf16>
    %48 = vector.shape_cast %47 : vector<1x16x128xbf16> to vector<16x128xbf16>
    %c2_50 = arith.constant 2 : index
    %c0_51 = arith.constant 0 : index
    %c0_52 = arith.constant 0 : index
    %49 = vector.load %arg4[%c2_50, %c0_51, %c0_52] : memref<3x128x128xbf16, #tpu.memory_space<vmem>>, vector<1x128x128xbf16>
    %50 = vector.shape_cast %49 : vector<1x128x128xbf16> to vector<128x128xbf16>
    %cst_53 = arith.constant dense<0.000000e+00> : vector<16x128xf32>
    %51 = tpu.matmul %48, %50, %cst_53 {dimension_numbers = #tpu.dot_dimension_numbers<[1], [0], [0], [1], [0, 0, 1, 1], [], []>} : vector<16x128xbf16>, vector<128x128xbf16>, vector<16x128xf32> -> vector<16x128xf32>
    %52 = arith.addf %46, %51 : vector<16x128xf32>
    %53 = vector.broadcast %35 : vector<1x128xf32> to vector<16x128xf32>
    %54 = arith.addf %52, %53 : vector<16x128xf32>
    %cst_54 = arith.constant 0.000000e+00 : f32
    %55 = vector.broadcast %cst_54 : f32 to vector<16x128xf32>
    %56 = arith.cmpf oge, %54, %55 : vector<16x128xf32>
    %cst_55 = arith.constant 2.000000e-01 : f32
    %57 = vector.broadcast %cst_55 : f32 to vector<16x128xf32>
    %58 = arith.mulf %57, %54 : vector<16x128xf32>
    %59 = arith.select %56, %54, %58 : vector<16x128xi1>, vector<16x128xf32>
    %60 = vector.shape_cast %59 : vector<16x128xf32> to vector<1x16x128xf32>
    %c0_56 = arith.constant 0 : index
    %c0_57 = arith.constant 0 : index
    %c0_58 = arith.constant 0 : index
    %61 = vector.load %arg6[%c0_56, %c0_57, %c0_58] : memref<1x16x128xf32, #tpu.memory_space<vmem>>, vector<1x16x128xf32>
    tpu.vector_store %arg6[%c0_56, %c0_57, %c0_58], %60 {strides = array<i32>} : memref<1x16x128xf32, #tpu.memory_space<vmem>>, vector<1x16x128xf32>,
    return
  }
  func.func @transform_0(%arg0: i32) -> (i32, i32, i32) {
    %c0_i32 = arith.constant 0 : i32
    %c0_i32_0 = arith.constant 0 : i32
    %c0_i32_1 = arith.constant 0 : i32
    return %arg0, %c0_i32, %c0_i32_0 : i32, i32, i32
  }
  func.func @transform_1(%arg0: i32) -> (i32, i32, i32) {
    %c0_i32 = arith.constant 0 : i32
    %c0_i32_0 = arith.constant 0 : i32
    %c0_i32_1 = arith.constant 0 : i32
    %c0_i32_2 = arith.constant 0 : i32
    return %c0_i32, %c0_i32_0, %c0_i32_1 : i32, i32, i32
  }
  func.func @transform_2(%arg0: i32) -> (i32, i32) {
    %c0_i32 = arith.constant 0 : i32
    %c0_i32_0 = arith.constant 0 : i32
    %c0_i32_1 = arith.constant 0 : i32
    return %c0_i32, %c0_i32_0 : i32, i32
  }
  func.func @transform_3(%arg0: i32) -> (i32, i32, i32) {
    %c0_i32 = arith.constant 0 : i32
    %c0_i32_0 = arith.constant 0 : i32
    %c0_i32_1 = arith.constant 0 : i32
    %c0_i32_2 = arith.constant 0 : i32
    return %c0_i32, %c0_i32_0, %c0_i32_1 : i32, i32, i32
  }
  func.func @transform_4(%arg0: i32) -> (i32, i32) {
    %c0_i32 = arith.constant 0 : i32
    %c0_i32_0 = arith.constant 0 : i32
    %c0_i32_1 = arith.constant 0 : i32
    return %c0_i32, %c0_i32_0 : i32, i32
  }
  func.func @transform_5(%arg0: i32) -> (i32, i32, i32) {
    %c0_i32 = arith.constant 0 : i32
    %c0_i32_0 = arith.constant 0 : i32
    %c0_i32_1 = arith.constant 0 : i32
    return %arg0, %c0_i32, %c0_i32_0 : i32, i32, i32
  }
}

</mosaic_0001>

<llo_original>
// kernel: tile.13
$region0: #{tile.13}
  #allocation0 [shape = 's32[1]{0}', space=sflag, size = 0x4, scoped, tag = 'scoped memory for tile.13']
  %s0 = inlined_call_operand.vmem [shape: f32[8], index: 0, kind: input, shape index: {}]
  %s1 = inlined_call_operand.vmem [shape: f32[16,8], index: 1, kind: output, shape index: {}]
  // Predicated region
  $region2: #{tile.13} parent=0 // pred_check
    _
  $region3: #{tile.13} parent=0 // pred_check_branch
    %3 = sbr.rel (0) target = $region5
  $region4: #{tile.13} parent=0 // pred_region
    _
  $region5: #{tile.13} parent=0 // pred_fallthru
    _
  %v4 = vld [vmem:[%s0] ss:$0 sm:$0xff]
  %5 = vst [vmem:[%s1] sm:$0xff] %v4
  %s6 = scalar_lea.vmem %s1, 8
  %7 = vst [vmem:[%s6] sm:$0xff] %v4

// kernel: tile.14
$region0: #{tile.14}
  %s0 = inlined_call_operand.vmem [shape: f32[16,8], index: 0, kind: input, shape index: {}]
  %s1 = inlined_call_operand.vmem [shape: f32[1,128], index: 1, kind: output, shape index: {}]
  $region1: #{tile.14} parent=0
    #allocation0 [shape = 'u8[4096]{0}', space=vmem, size = 0x1000, scoped, tag = 'scoped mem for output reshape']
    %v2 = vld [vmem:[%s0] sm:$0x1]
    %vm3 = vcmask 64512
    %4 = vst.msk [vmem:[#allocation0] sm:$0x1] %vm3, %v2
    %s5 = scalar_lea.vmem %s0, 15
    %v6 = vld [vmem:[%s5] sm:$0x1]
    %7 = vrot.lane.b32.xlu0 %v6, 120
    %v8 = vpop.permute.xlu0 %7
    %vm9 = vcmask 1048512
    %10 = vst.msk [vmem:[#allocation0] sm:$0x1] %vm9, %v8
    %s11 = scalar_lea.vmem %s0, 14
    %v12 = vld [vmem:[%s11] sm:$0x1]
    %13 = vrot.lane.b32.xlu0 %v12, 112
    %v14 = vpop.permute.xlu0 %13
    %vm15 = vcmask 982912
    %16 = vst.msk [vmem:[#allocation0] sm:$0x1] %vm15, %v14
    %s17 = scalar_lea.vmem %s0, 13
    %v18 = vld [vmem:[%s17] sm:$0x1]
    %19 = vrot.lane.b32.xlu0 %v18, 104
    %v20 = vpop.permute.xlu0 %19
    %vm21 = vcmask 917312
    %22 = vst.msk [vmem:[#allocation0] sm:$0x1] %vm21, %v20
    %s23 = scalar_lea.vmem %s0, 12
    %v24 = vld [vmem:[%s23] sm:$0x1]
    %25 = vrot.lane.b32.xlu0 %v24, 96
    %v26 = vpop.permute.xlu0 %25
    %vm27 = vcmask 851712
    %28 = vst.msk [vmem:[#allocation0] sm:$0x1] %vm27, %v26
    %s29 = scalar_lea.vmem %s0, 11
    %v30 = vld [vmem:[%s29] sm:$0x1]
    %31 = vrot.lane.b32.xlu0 %v30, 88
    %v32 = vpop.permute.xlu0 %31
    %vm33 = vcmask 786112
    %34 = vst.msk [vmem:[#allocation0] sm:$0x1] %vm33, %v32
    %s35 = scalar_lea.vmem %s0, 10
    %v36 = vld [vmem:[%s35] sm:$0x1]
    %37 = vrot.lane.b32.xlu0 %v36, 80
    %v38 = vpop.permute.xlu0 %37
    %vm39 = vcmask 720512
    %40 = vst.msk [vmem:[#allocation0] sm:$0x1] %vm39, %v38
    %s41 = scalar_lea.vmem %s0, 9
    %v42 = vld [vmem:[%s41] sm:$0x1]
    %43 = vrot.lane.b32.xlu0 %v42, 72
    %v44 = vpop.permute.xlu0 %43
    %vm45 = vcmask 654912
    %46 = vst.msk [vmem:[#allocation0] sm:$0x1] %vm45, %v44
    %s47 = scalar_lea.vmem %s0, 8
    %v48 = vld [vmem:[%s47] sm:$0x1]
    %49 = vrot.lane.b32.xlu0 %v48, 64
    %v50 = vpop.permute.xlu0 %49
    %vm51 = vcmask 589312
    %52 = vst.msk [vmem:[#allocation0] sm:$0x1] %vm51, %v50
    %s53 = scalar_lea.vmem %s0, 7
    %v54 = vld [vmem:[%s53] sm:$0x1]
    %55 = vrot.lane.b32.xlu0 %v54, 56
    %v56 = vpop.permute.xlu0 %55
    %vm57 = vcmask 523712
    %58 = vst.msk [vmem:[#allocation0] sm:$0x1] %vm57, %v56
    %s59 = scalar_lea.vmem %s0, 6
    %v60 = vld [vmem:[%s59] sm:$0x1]
    %61 = vrot.lane.b32.xlu0 %v60, 48
    %v62 = vpop.permute.xlu0 %61
    %vm63 = vcmask 458112
    %64 = vst.msk [vmem:[#allocation0] sm:$0x1] %vm63, %v62
    %s65 = scalar_lea.vmem %s0, 5
    %v66 = vld [vmem:[%s65] sm:$0x1]
    %67 = vrot.lane.b32.xlu0 %v66, 40
    %v68 = vpop.permute.xlu0 %67
    %vm69 = vcmask 392512
    %70 = vst.msk [vmem:[#allocation0] sm:$0x1] %vm69, %v68
    %s71 = scalar_lea.vmem %s0, 4
    %v72 = vld [vmem:[%s71] sm:$0x1]
    %73 = vrot.lane.b32.xlu0 %v72, 32
    %v74 = vpop.permute.xlu0 %73
    %vm75 = vcmask 326912
    %76 = vst.msk [vmem:[#allocation0] sm:$0x1] %vm75, %v74
    %s77 = scalar_lea.vmem %s0, 3
    %v78 = vld [vmem:[%s77] sm:$0x1]
    %79 = vrot.lane.b32.xlu0 %v78, 24
    %v80 = vpop.permute.xlu0 %79
    %vm81 = vcmask 261312
    %82 = vst.msk [vmem:[#allocation0] sm:$0x1] %vm81, %v80
    %s83 = scalar_lea.vmem %s0, 2
    %v84 = vld [vmem:[%s83] sm:$0x1]
    %85 = vrot.lane.b32.xlu0 %v84, 16
    %v86 = vpop.permute.xlu0 %85
    %vm87 = vcmask 195712
    %88 = vst.msk [vmem:[#allocation0] sm:$0x1] %vm87, %v86
    %s89 = scalar_lea.vmem %s0, 1
    %v90 = vld [vmem:[%s89] sm:$0x1]
    %91 = vrot.lane.b32.xlu0 %v90, 8
    %v92 = vpop.permute.xlu0 %91
    %vm93 = vcmask 130112
    %94 = vst.msk [vmem:[#allocation0] sm:$0x1] %vm93, %v92
    %s96 = sshllo.u32 0, 1
    %v98 = vld [vmem:[#allocation0] sm:%s96]
    %s99 = sshllo.u32 0, 1
    %100 = vst [vmem:[%s1] sm:%s99] %v98

// kernel: convblock_forward.1
$region0: #{convblock_forward.1}
  #allocation0 [shape = 'u32[]', space=smem, size = 0x4, offset = 0x4, fixed_abs, tag = 'smem constant byte address 0x4 - core index']
  #allocation1 [shape = 'u32[144,128]{1,0:T(1,128)}', space=vmem, size = 0x12000, scoped, tag = 'internal scratch']
  #allocation2 [shape = 'bf16[1,18,128]{2,1,0:T(8,128)(2,1)}', space=vmem, size = 0x1800, scoped, tag = 'scratch operand']
  %s0 = inlined_call_operand.vmem [shape: f32[2,18,128], index: 0, kind: input, shape index: {}]
  %s1 = inlined_call_operand.vmem [shape: bf16[3,128,128], index: 1, kind: input, shape index: {}]
  %s2 = inlined_call_operand.vmem [shape: f32[1,128], index: 2, kind: input, shape index: {}]
  %s3 = inlined_call_operand.vmem [shape: bf16[3,128,128], index: 3, kind: input, shape index: {}]
  %s4 = inlined_call_operand.vmem [shape: f32[1,128], index: 4, kind: input, shape index: {}]
  %s5 = inlined_call_operand.vmem [shape: f32[2,16,128], index: 5, kind: output, shape index: {}]
  %s6 = sld [smem:[#allocation0]]
  $region53: #{convblock_forward.1} parent=0
    _
  %s8 = ssub.s32 1, %s6
  %s9 = scalar_select 0, %s8, %s6
  loop: start=0, step=1, limit=4
  $region2: #{convblock_forward.1} parent=0 // loop_pre_header
    _
  $region3: #{convblock_forward.1} parent=0 // loop_header
    %s11 = sphi 0, %s15
    %p12 = scmp.ge.s32.totalorder %s11, 4
    %s21 = sphi 0, %s23
    %s24 = sphi 0, %s21
    %s25 = sphi 0, %s24
    %s41 = sphi 0, %s25
    %s45 = sphi 0, %s45
    %s47 = sphi 0, %s45
    %s48 = sphi 0, %s47
    %s62 = sphi 0, %s48
    %s66 = sphi 0, %s66
    %s68 = sphi 0, %s66
    %s69 = sphi 0, %s68
    %s83 = sphi 0, %s69
    %s87 = sphi 0, %s87
    %s89 = sphi 0, %s87
    %s90 = sphi 0, %s89
    %s104 = sphi 0, %s90
    %s108 = sphi 0, %s108
    %s110 = sphi 0, %s108
    %s111 = sphi 0, %s110
    %s125 = sphi 0, %s111
    %s131 = sphi 0, %s133
    %s134 = sphi 0, %s131
    %s135 = sphi 0, %s134
    %s151 = sphi 0, %s135
  $region4: #{convblock_forward.1} parent=0 // loop_header_branch
    %14 = sbr.rel (%p12) target = $region8
  $region5: #{convblock_forward.1} parent=0 // loop_body
    %s16 = ssub.s32 %s11, 1
    %s17 = ssub.s32 %s11, 2
    %s18 = sadd.s32 %s11, 1
    %s19 = ssub.s32 %s11, %s18
    %p20 = scmp.eq.s32.totalorder %s19, 0
    %s22 = sadd.s32 %s21, 1
    %s23 = scalar_select %p20, %s21, %s22
    %p26 = pneg %p20
    %p27 = scmp.eq.s32.totalorder %s11, 1
    %p28 = por %p26, %p27
    %p29 = scmp.ne.s32.totalorder %s21, %s24
    %p30 = scmp.eq.s32.totalorder %s11, 0
    %p31 = por %p29, %p30
    %p32 = scmp.ne.s32.totalorder %s21, %s24
    %p33 = scmp.eq.s32.totalorder %s16, 1
    %p34 = por %p32, %p33
    %p35 = scmp.ne.s32.totalorder %s24, %s25
    %p36 = scmp.eq.s32.totalorder %s16, 0
    %p37 = por %p35, %p36
    %p38 = scmp.ne.s32.totalorder %s24, %s25
    %p39 = scmp.eq.s32.totalorder %s17, 1
    %p40 = por %p38, %p39
    %p42 = scmp.ne.s32.totalorder %s25, %s41
    %p43 = scmp.eq.s32.totalorder %s17, 0
    %p44 = por %p42, %p43
    %s46 = sadd.s32 %s45, 1
    %p49 = scmp.eq.s32.totalorder %s11, 1
    %p50 = scmp.ne.s32.totalorder %s45, %s47
    %p51 = scmp.eq.s32.totalorder %s11, 0
    %p52 = por %p50, %p51
    %p53 = scmp.ne.s32.totalorder %s45, %s47
    %p54 = scmp.eq.s32.totalorder %s16, 1
    %p55 = por %p53, %p54
    %p56 = scmp.ne.s32.totalorder %s47, %s48
    %p57 = scmp.eq.s32.totalorder %s16, 0
    %p58 = por %p56, %p57
    %p59 = scmp.ne.s32.totalorder %s47, %s48
    %p60 = scmp.eq.s32.totalorder %s17, 1
    %p61 = por %p59, %p60
    %p63 = scmp.ne.s32.totalorder %s48, %s62
    %p64 = scmp.eq.s32.totalorder %s17, 0
    %p65 = por %p63, %p64
    %s67 = sadd.s32 %s66, 1
    %p70 = scmp.eq.s32.totalorder %s11, 1
    %p71 = scmp.ne.s32.totalorder %s66, %s68
    %p72 = scmp.eq.s32.totalorder %s11, 0
    %p73 = por %p71, %p72
    %p74 = scmp.ne.s32.totalorder %s66, %s68
    %p75 = scmp.eq.s32.totalorder %s16, 1
    %p76 = por %p74, %p75
    %p77 = scmp.ne.s32.totalorder %s68, %s69
    %p78 = scmp.eq.s32.totalorder %s16, 0
    %p79 = por %p77, %p78
    %p80 = scmp.ne.s32.totalorder %s68, %s69
    %p81 = scmp.eq.s32.totalorder %s17, 1
    %p82 = por %p80, %p81
    %p84 = scmp.ne.s32.totalorder %s69, %s83
    %p85 = scmp.eq.s32.totalorder %s17, 0
    %p86 = por %p84, %p85
    %s88 = sadd.s32 %s87, 1
    %p91 = scmp.eq.s32.totalorder %s11, 1
    %p92 = scmp.ne.s32.totalorder %s87, %s89
    %p93 = scmp.eq.s32.totalorder %s11, 0
    %p94 = por %p92, %p93
    %p95 = scmp.ne.s32.totalorder %s87, %s89
    %p96 = scmp.eq.s32.totalorder %s16, 1
    %p97 = por %p95, %p96
    %p98 = scmp.ne.s32.totalorder %s89, %s90
    %p99 = scmp.eq.s32.totalorder %s16, 0
    %p100 = por %p98, %p99
    %p101 = scmp.ne.s32.totalorder %s89, %s90
    %p102 = scmp.eq.s32.totalorder %s17, 1
    %p103 = por %p101, %p102
    %p105 = scmp.ne.s32.totalorder %s90, %s104
    %p106 = scmp.eq.s32.totalorder %s17, 0
    %p107 = por %p105, %p106
    %s109 = sadd.s32 %s108, 1
    %p112 = scmp.eq.s32.totalorder %s11, 1
    %p113 = scmp.ne.s32.totalorder %s108, %s110
    %p114 = scmp.eq.s32.totalorder %s11, 0
    %p115 = por %p113, %p114
    %p116 = scmp.ne.s32.totalorder %s108, %s110
    %p117 = scmp.eq.s32.totalorder %s16, 1
    %p118 = por %p116, %p117
    %p119 = scmp.ne.s32.totalorder %s110, %s111
    %p120 = scmp.eq.s32.totalorder %s16, 0
    %p121 = por %p119, %p120
    %p122 = scmp.ne.s32.totalorder %s110, %s111
    %p123 = scmp.eq.s32.totalorder %s17, 1
    %p124 = por %p122, %p123
    %p126 = scmp.ne.s32.totalorder %s111, %s125
    %p127 = scmp.eq.s32.totalorder %s17, 0
    %p128 = por %p126, %p127
    %s129 = ssub.s32 %s11, %s18
    %p130 = scmp.eq.s32.totalorder %s129, 0
    %s132 = sadd.s32 %s131, 1
    %s133 = scalar_select %p130, %s131, %s132
    %p136 = pneg %p130
    %p137 = scmp.eq.s32.totalorder %s11, 1
    %p138 = por %p136, %p137
    %p139 = scmp.ne.s32.totalorder %s131, %s134
    %p140 = scmp.eq.s32.totalorder %s11, 0
    %p141 = por %p139, %p140
    %p142 = scmp.ne.s32.totalorder %s131, %s134
    %p143 = scmp.eq.s32.totalorder %s16, 1
    %p144 = por %p142, %p143
    %p145 = scmp.ne.s32.totalorder %s134, %s135
    %p146 = scmp.eq.s32.totalorder %s16, 0
    %p147 = por %p145, %p146
    %p148 = scmp.ne.s32.totalorder %s134, %s135
    %p149 = scmp.eq.s32.totalorder %s17, 1
    %p150 = por %p148, %p149
    %p152 = scmp.ne.s32.totalorder %s135, %s151
    %p153 = scmp.eq.s32.totalorder %s17, 0
    %p154 = por %p152, %p153
    %p155 = scmp.le.s32.totalorder 1, %s11
    %p156 = scmp.lt.s32.totalorder %s11, 3
    %p157 = pnand %p155, %p156
    %p158 = pneg %p157
    // Predicated region
    $region9: #{convblock_forward.1} parent=5 // pred_check
      _
    $region10: #{convblock_forward.1} parent=5 // pred_check_branch
      %160 = sbr.rel (%p157) target = $region12
    $region11: #{convblock_forward.1} parent=5 // pred_region
      %s161 = ssub.s32 %s11, 1
      // Predicated region
      $region13: #{convblock_forward.1} parent=11 // pred_check
        %p162 = pneg %p58
      $region14: #{convblock_forward.1} parent=11 // pred_check_branch
        %164 = sbr.rel (%p162) target = $region16
      $region15: #{convblock_forward.1} parent=11 // pred_region
        _
      $region16: #{convblock_forward.1} parent=11 // pred_fallthru
        _
      // Predicated region
      $region17: #{convblock_forward.1} parent=11 // pred_check
        %p165 = pneg %p79
      $region18: #{convblock_forward.1} parent=11 // pred_check_branch
        %167 = sbr.rel (%p165) target = $region20
      $region19: #{convblock_forward.1} parent=11 // pred_region
        _
      $region20: #{convblock_forward.1} parent=11 // pred_fallthru
        _
      // Predicated region
      $region21: #{convblock_forward.1} parent=11 // pred_check
        %p168 = pneg %p100
      $region22: #{convblock_forward.1} parent=11 // pred_check_branch
        %170 = sbr.rel (%p168) target = $region24
      $region23: #{convblock_forward.1} parent=11 // pred_region
        _
      $region24: #{convblock_forward.1} parent=11 // pred_fallthru
        _
      // Predicated region
      $region25: #{convblock_forward.1} parent=11 // pred_check
        %p171 = pneg %p121
      $region26: #{convblock_forward.1} parent=11 // pred_check_branch
        %173 = sbr.rel (%p171) target = $region28
      $region27: #{convblock_forward.1} parent=11 // pred_region
        _
      $region28: #{convblock_forward.1} parent=11 // pred_fallthru
        _
    $region12: #{convblock_forward.1} parent=5 // pred_fallthru
      _
    %p174 = scmp.lt.s32.totalorder %s11, 2
    // Predicated region
    $region29: #{convblock_forward.1} parent=5 // pred_check
      %p175 = pneg %p174
    $region30: #{convblock_forward.1} parent=5 // pred_check_branch
      %177 = sbr.rel (%p175) target = $region32
    $region31: #{convblock_forward.1} parent=5 // pred_region
      // Predicated region
      $region33: #{convblock_forward.1} parent=31 // pred_check
        %p178 = pneg %p31
      $region34: #{convblock_forward.1} parent=31 // pred_check_branch
        %180 = sbr.rel (%p178) target = $region36
      $region35: #{convblock_forward.1} parent=31 // pred_region
        %p181 = scmp.lt.s32.totalorder %s11, 1
        %s182 = scalar_select %p181, %s11, 1
        %s183 = smul.addr %s182, 3
        %s184 = smul.addr %s183, 8
        %s185 = scalar_lea.vmem %s0, %s184
      $region36: #{convblock_forward.1} parent=31 // pred_fallthru
        _
    $region32: #{convblock_forward.1} parent=5 // pred_fallthru
      _
    %p186 = scmp.le.s32.totalorder 1, %s11
    %p187 = scmp.lt.s32.totalorder %s11, 3
    %p188 = pnand %p186, %p187
    %p189 = pneg %p188
    // Predicated region
    $region37: #{convblock_forward.1} parent=5 // pred_check
      _
    $region38: #{convblock_forward.1} parent=5 // pred_check_branch
      %191 = sbr.rel (%p188) target = $region40
    $region39: #{convblock_forward.1} parent=5 // pred_region
      %s192 = ssub.s32 %s11, 1
      %p193 = scmp.lt.s32.totalorder %s16, 1
      %s194 = scalar_select %p193, %s16, 1
      %s195 = smul.addr %s194, 3
      %s196 = smul.addr %s195, 8
      %s197 = scalar_lea.vmem %s0, %s196
      %p198 = pneg %p37
      %p199 = pneg %p34
      %p200 = pneg %p58
      %p201 = pneg %p55
      %p202 = pneg %p79
      %p203 = pneg %p76
      %p204 = pneg %p100
      %p205 = pneg %p97
      %p206 = pneg %p121
      %p207 = pneg %p118
      %p208 = pneg %p147
      %p209 = pneg %p144
      %p210 = scmp.lt.s32.totalorder %s16, 1
      %s211 = scalar_select %p210, %s16, 1
      %s212 = smul.addr %s211, 2
      %s213 = smul.addr %s212, 8
      %s214 = scalar_lea.vmem %s5, %s213
      %p215 = scmp.lt.s32.totalorder %s16, 1
      %s216 = scalar_select %p215, %s16, 1
      %s217 = smul.addr %s216, 3
      %s218 = smul.addr %s217, 8
      %s219 = scalar_lea.vmem %s0, %s218
      %p220 = scmp.lt.s32.totalorder %s16, 1
      %s221 = scalar_select %p220, %s16, 1
      %s222 = smul.addr %s221, 2
      %s223 = smul.addr %s222, 8
      %s224 = scalar_lea.vmem %s5, %s223
      %v226 = vld [vmem:[%s2] sm:$0x1]
      %v227 = vld [vmem:[%s219] sm:$0xff]
      %v228 = vld [vmem:[%s219 + $0x8] sm:$0xff]
      %v229 = vpack.c.bf16 %v228, %v227
      %v230 = vld [vmem:[%s1] sm:$0xf]
      %v231 = vld [vmem:[%s1 + $0x4] sm:$0xf]
      %v232 = vld [vmem:[%s1 + $0x8] sm:$0xf]
      %v233 = vld [vmem:[%s1 + $0xc] sm:$0xf]
      %v234 = vld [vmem:[%s1 + $0x10] sm:$0xf]
      %v235 = vld [vmem:[%s1 + $0x14] sm:$0xf]
      %v236 = vld [vmem:[%s1 + $0x18] sm:$0xf]
      %v237 = vld [vmem:[%s1 + $0x1c] sm:$0xf]
      %v238 = vld [vmem:[%s1 + $0x20] sm:$0xf]
      %v239 = vld [vmem:[%s1 + $0x24] sm:$0xf]
      %v240 = vld [vmem:[%s1 + $0x28] sm:$0xf]
      %v241 = vld [vmem:[%s1 + $0x2c] sm:$0xf]
      %v242 = vld [vmem:[%s1 + $0x30] sm:$0xf]
      %v243 = vld [vmem:[%s1 + $0x34] sm:$0xf]
      %v244 = vld [vmem:[%s1 + $0x38] sm:$0xf]
      %v245 = vld [vmem:[%s1 + $0x3c] sm:$0xf]
      %v246 = vld [vmem:[%s219 + $0x1] sm:$0xff]
      %v247 = vld [vmem:[%s219 + $0x9] sm:$0xff]
      %v248 = vpack.c.bf16 %v247, %v246
      %s249 = scalar_lea.vmem %s1, 64
      %v250 = vld [vmem:[%s249] sm:$0xf]
      %v251 = vld [vmem:[%s249 + $0x4] sm:$0xf]
      %v252 = vld [vmem:[%s249 + $0x8] sm:$0xf]
      %v253 = vld [vmem:[%s249 + $0xc] sm:$0xf]
      %v254 = vld [vmem:[%s249 + $0x10] sm:$0xf]
      %v255 = vld [vmem:[%s249 + $0x14] sm:$0xf]
      %v256 = vld [vmem:[%s249 + $0x18] sm:$0xf]
      %v257 = vld [vmem:[%s249 + $0x1c] sm:$0xf]
      %v258 = vld [vmem:[%s249 + $0x20] sm:$0xf]
      %v259 = vld [vmem:[%s249 + $0x24] sm:$0xf]
      %v260 = vld [vmem:[%s249 + $0x28] sm:$0xf]
      %v261 = vld [vmem:[%s249 + $0x2c] sm:$0xf]
      %v262 = vld [vmem:[%s249 + $0x30] sm:$0xf]
      %v263 = vld [vmem:[%s249 + $0x34] sm:$0xf]
      %v264 = vld [vmem:[%s249 + $0x38] sm:$0xf]
      %v265 = vld [vmem:[%s249 + $0x3c] sm:$0xf]
      %v282 = vunpack.c.l.b16 %v250
      %v283 = vunpack.c.l.b16 %v251
      %v284 = vunpack.c.l.b16 %v252
      %v285 = vunpack.c.l.b16 %v253
      %v286 = vunpack.c.l.b16 %v254
      %v287 = vunpack.c.l.b16 %v255
      %v288 = vunpack.c.l.b16 %v256
      %v289 = vunpack.c.l.b16 %v257
      %v290 = vunpack.c.l.b16 %v258
      %v291 = vunpack.c.l.b16 %v259
      %v292 = vunpack.c.l.b16 %v260
      %v293 = vunpack.c.l.b16 %v261
      %v294 = vunpack.c.l.b16 %v262
      %v295 = vunpack.c.l.b16 %v263
      %v296 = vunpack.c.l.b16 %v264
      %v297 = vunpack.c.l.b16 %v265
      %v298 = vpack.c.b16 %v283, %v282
      %v299 = vpack.c.b16 %v285, %v284
      %v300 = vpack.c.b16 %v287, %v286
      %v301 = vpack.c.b16 %v289, %v288
      %v302 = vpack.c.b16 %v291, %v290
      %v303 = vpack.c.b16 %v293, %v292
      %v304 = vpack.c.b16 %v295, %v294
      %v305 = vpack.c.b16 %v297, %v296
      %314 = vmatprep.subr.bf16.mxu0 0
      %315 = vmatpush1.bf16.msra.mxu0 %v298
      %316 = vmatprep.subr.bf16.mxu0 0
      %317 = vmatpush1.bf16.msra.mxu0 %v299
      %318 = vmatprep.subr.bf16.mxu0 0
      %319 = vmatpush1.bf16.msra.mxu0 %v300
      %320 = vmatprep.subr.bf16.mxu0 0
      %321 = vmatpush1.bf16.msra.mxu0 %v301
      %322 = vmatprep.subr.bf16.mxu0 0
      %323 = vmatpush1.bf16.msra.mxu0 %v302
      %324 = vmatprep.subr.bf16.mxu0 0
      %325 = vmatpush1.bf16.msra.mxu0 %v303
      %326 = vmatprep.subr.bf16.mxu0 0
      %327 = vmatpush1.bf16.msra.mxu0 %v304
      %328 = vmatprep.subr.bf16.mxu0 0
      %329 = vmatpush1.bf16.msra.mxu0 %v305
      %330 = vmatprep.subr.bf16.mxu0 0
      %331 = vmatpush1.bf16.msra.mxu0 0
      %332 = vmatprep.subr.bf16.mxu0 0
      %333 = vmatpush1.bf16.msra.mxu0 0
      %334 = vmatprep.subr.bf16.mxu0 0
      %335 = vmatpush1.bf16.msra.mxu0 0
      %336 = vmatprep.subr.bf16.mxu0 0
      %337 = vmatpush1.bf16.msra.mxu0 0
      %338 = vmatprep.subr.bf16.mxu0 0
      %339 = vmatpush1.bf16.msra.mxu0 0
      %340 = vmatprep.subr.bf16.mxu0 0
      %341 = vmatpush1.bf16.msra.mxu0 0
      %342 = vmatprep.subr.bf16.mxu0 0
      %343 = vmatpush1.bf16.msra.mxu0 0
      %344 = vmatprep.subr.bf16.mxu0 0
      %345 = vmatpush1.bf16.msra.mxu0 0
      %346 = vmatprep.mubr.bf16.mxu0 0
      %347 = vmatmul.mubr.bf16.gmra.mrb[0].mxu0 %v248
      %v348 = vpop.f32.mrb[0].mxu0
      %v349 = vadd.f32 0.0, %v348
      %v350 = vpop.f32.mrb[0].mxu0
      %v351 = vpop.f32.mrb[0].mxu0
      %v352 = vadd.f32 0.0, %v351
      %v353 = vpop.f32.mrb[0].mxu0
      %354 = vdwg.mxu0
      %v371 = vunpack.c.l.b16 %v230
      %v372 = vunpack.c.l.b16 %v231
      %v373 = vunpack.c.l.b16 %v232
      %v374 = vunpack.c.l.b16 %v233
      %v375 = vunpack.c.l.b16 %v234
      %v376 = vunpack.c.l.b16 %v235
      %v377 = vunpack.c.l.b16 %v236
      %v378 = vunpack.c.l.b16 %v237
      %v379 = vunpack.c.l.b16 %v238
      %v380 = vunpack.c.l.b16 %v239
      %v381 = vunpack.c.l.b16 %v240
      %v382 = vunpack.c.l.b16 %v241
      %v383 = vunpack.c.l.b16 %v242
      %v384 = vunpack.c.l.b16 %v243
      %v385 = vunpack.c.l.b16 %v244
      %v386 = vunpack.c.l.b16 %v245
      %v387 = vpack.c.b16 %v372, %v371
      %v388 = vpack.c.b16 %v374, %v373
      %v389 = vpack.c.b16 %v376, %v375
      %v390 = vpack.c.b16 %v378, %v377
      %v391 = vpack.c.b16 %v380, %v379
      %v392 = vpack.c.b16 %v382, %v381
      %v393 = vpack.c.b16 %v384, %v383
      %v394 = vpack.c.b16 %v386, %v385
      %403 = vmatprep.subr.bf16.mxu0 0
      %404 = vmatpush1.bf16.msra.mxu0 %v387
      %405 = vmatprep.subr.bf16.mxu0 0
      %406 = vmatpush1.bf16.msra.mxu0 %v388
      %407 = vmatprep.subr.bf16.mxu0 0
      %408 = vmatpush1.bf16.msra.mxu0 %v389
      %409 = vmatprep.subr.bf16.mxu0 0
      %410 = vmatpush1.bf16.msra.mxu0 %v390
      %411 = vmatprep.subr.bf16.mxu0 0
      %412 = vmatpush1.bf16.msra.mxu0 %v391
      %413 = vmatprep.subr.bf16.mxu0 0
      %414 = vmatpush1.bf16.msra.mxu0 %v392
      %415 = vmatprep.subr.bf16.mxu0 0
      %416 = vmatpush1.bf16.msra.mxu0 %v393
      %417 = vmatprep.subr.bf16.mxu0 0
      %418 = vmatpush1.bf16.msra.mxu0 %v394
      %419 = vmatprep.subr.bf16.mxu0 0
      %420 = vmatpush1.bf16.msra.mxu0 0
      %421 = vmatprep.subr.bf16.mxu0 0
      %422 = vmatpush1.bf16.msra.mxu0 0
      %423 = vmatprep.subr.bf16.mxu0 0
      %424 = vmatpush1.bf16.msra.mxu0 0
      %425 = vmatprep.subr.bf16.mxu0 0
      %426 = vmatpush1.bf16.msra.mxu0 0
      %427 = vmatprep.subr.bf16.mxu0 0
      %428 = vmatpush1.bf16.msra.mxu0 0
      %429 = vmatprep.subr.bf16.mxu0 0
      %430 = vmatpush1.bf16.msra.mxu0 0
      %431 = vmatprep.subr.bf16.mxu0 0
      %432 = vmatpush1.bf16.msra.mxu0 0
      %433 = vmatprep.subr.bf16.mxu0 0
      %434 = vmatpush1.bf16.msra.mxu0 0
      %435 = vmatprep.mubr.bf16.mxu0 0
      %436 = vmatmul.mubr.bf16.gmra.mrb[0].mxu0 %v229
      %v437 = vpop.f32.mrb[0].mxu0
      %v438 = vadd.f32 %v349, %v437
      %v439 = vpop.f32.mrb[0].mxu0
      %v440 = vpop.f32.mrb[0].mxu0
      %v441 = vadd.f32 %v352, %v440
      %v442 = vpop.f32.mrb[0].mxu0
      %443 = vdwg.mxu0
      %v444 = vld [vmem:[%s219 + $0x2] sm:$0xff]
      %v445 = vld [vmem:[%s219 + $0xa] sm:$0xff]
      %v446 = vpack.c.bf16 %v445, %v444
      %s447 = scalar_lea.vmem %s1, 128
      %v448 = vld [vmem:[%s447] sm:$0xf]
      %v449 = vld [vmem:[%s447 + $0x4] sm:$0xf]
      %v450 = vld [vmem:[%s447 + $0x8] sm:$0xf]
      %v451 = vld [vmem:[%s447 + $0xc] sm:$0xf]
      %v452 = vld [vmem:[%s447 + $0x10] sm:$0xf]
      %v453 = vld [vmem:[%s447 + $0x14] sm:$0xf]
      %v454 = vld [vmem:[%s447 + $0x18] sm:$0xf]
      %v455 = vld [vmem:[%s447 + $0x1c] sm:$0xf]
      %v456 = vld [vmem:[%s447 + $0x20] sm:$0xf]
      %v457 = vld [vmem:[%s447 + $0x24] sm:$0xf]
      %v458 = vld [vmem:[%s447 + $0x28] sm:$0xf]
      %v459 = vld [vmem:[%s447 + $0x2c] sm:$0xf]
      %v460 = vld [vmem:[%s447 + $0x30] sm:$0xf]
      %v461 = vld [vmem:[%s447 + $0x34] sm:$0xf]
      %v462 = vld [vmem:[%s447 + $0x38] sm:$0xf]
      %v463 = vld [vmem:[%s447 + $0x3c] sm:$0xf]
      %v480 = vunpack.c.l.b16 %v448
      %v481 = vunpack.c.l.b16 %v449
      %v482 = vunpack.c.l.b16 %v450
      %v483 = vunpack.c.l.b16 %v451
      %v484 = vunpack.c.l.b16 %v452
      %v485 = vunpack.c.l.b16 %v453
      %v486 = vunpack.c.l.b16 %v454
      %v487 = vunpack.c.l.b16 %v455
      %v488 = vunpack.c.l.b16 %v456
      %v489 = vunpack.c.l.b16 %v457
      %v490 = vunpack.c.l.b16 %v458
      %v491 = vunpack.c.l.b16 %v459
      %v492 = vunpack.c.l.b16 %v460
      %v493 = vunpack.c.l.b16 %v461
      %v494 = vunpack.c.l.b16 %v462
      %v495 = vunpack.c.l.b16 %v463
      %v496 = vpack.c.b16 %v481, %v480
      %v497 = vpack.c.b16 %v483, %v482
      %v498 = vpack.c.b16 %v485, %v484
      %v499 = vpack.c.b16 %v487, %v486
      %v500 = vpack.c.b16 %v489, %v488
      %v501 = vpack.c.b16 %v491, %v490
      %v502 = vpack.c.b16 %v493, %v492
      %v503 = vpack.c.b16 %v495, %v494
      %512 = vmatprep.subr.bf16.mxu0 0
      %513 = vmatpush1.bf16.msra.mxu0 %v496
      %514 = vmatprep.subr.bf16.mxu0 0
      %515 = vmatpush1.bf16.msra.mxu0 %v497
      %516 = vmatprep.subr.bf16.mxu0 0
      %517 = vmatpush1.bf16.msra.mxu0 %v498
      %518 = vmatprep.subr.bf16.mxu0 0
      %519 = vmatpush1.bf16.msra.mxu0 %v499
      %520 = vmatprep.subr.bf16.mxu0 0
      %521 = vmatpush1.bf16.msra.mxu0 %v500
      %522 = vmatprep.subr.bf16.mxu0 0
      %523 = vmatpush1.bf16.msra.mxu0 %v501
      %524 = vmatprep.subr.bf16.mxu0 0
      %525 = vmatpush1.bf16.msra.mxu0 %v502
      %526 = vmatprep.subr.bf16.mxu0 0
      %527 = vmatpush1.bf16.msra.mxu0 %v503
      %528 = vmatprep.subr.bf16.mxu0 0
      %529 = vmatpush1.bf16.msra.mxu0 0
      %530 = vmatprep.subr.bf16.mxu0 0
      %531 = vmatpush1.bf16.msra.mxu0 0
      %532 = vmatprep.subr.bf16.mxu0 0
      %533 = vmatpush1.bf16.msra.mxu0 0
      %534 = vmatprep.subr.bf16.mxu0 0
      %535 = vmatpush1.bf16.msra.mxu0 0
      %536 = vmatprep.subr.bf16.mxu0 0
      %537 = vmatpush1.bf16.msra.mxu0 0
      %538 = vmatprep.subr.bf16.mxu0 0
      %539 = vmatpush1.bf16.msra.mxu0 0
      %540 = vmatprep.subr.bf16.mxu0 0
      %541 = vmatpush1.bf16.msra.mxu0 0
      %542 = vmatprep.subr.bf16.mxu0 0
      %543 = vmatpush1.bf16.msra.mxu0 0
      %544 = vmatprep.mubr.bf16.mxu0 0
      %545 = vmatmul.mubr.bf16.gmra.mrb[0].mxu0 %v446
      %v546 = vpop.f32.mrb[0].mxu0
      %v547 = vadd.f32 0.0, %v546
      %v548 = vpop.f32.mrb[0].mxu0
      %v549 = vpop.f32.mrb[0].mxu0
      %v550 = vadd.f32 0.0, %v549
      %v551 = vpop.f32.mrb[0].mxu0
      %552 = vdwg.mxu0
      %v553 = vadd.f32 %v438, %v547
      %v554 = vadd.f32 %v441, %v550
      %v556 = vlaneseq
      %v557 = vshrl.u32 %v556, 7
      %v558 = vsub.s32 0, %v557
      %v559 = vrot.slane %v226, %v558
      %v561 = vadd.f32 %v553, %v559
      %v562 = vadd.f32 %v554, %v559
      %vm563 = vcmp.ge.f32.partialorder %v561, 0.0
      %vm564 = vcmp.ge.f32.partialorder %v562, 0.0
      %v565 = vmul.f32 %v561, 0.2
      %v566 = vmul.f32 %v562, 0.2
      %v567 = vsel %vm563, %v561, %v565
      %v568 = vsel %vm564, %v562, %v566
      %vm569 = vcmask 1040384
      %vm570 = vsmask.f32 256
      %vm571 = vmand %vm569, %vm570
      %v572 = vld [vmem:[#allocation2] sm:$0x1]
      %v573 = vsel %vm571, 0, %v572
      %574 = vst [vmem:[#allocation2] sm:$0x1] %v573
      %vm575 = vsmask.f32 7938
      %vm576 = vmand %vm569, %vm575
      %v577 = vld [vmem:[#allocation2 + $0x8] sm:$0x1]
      %v578 = vsel %vm576, 0, %v577
      %579 = vst [vmem:[#allocation2 + $0x8] sm:$0x1] %v578
      %v580 = vpack.c.bf16 %v568, %v567
      %v582 = vunpack.c.l.b16 %v580
      %v583 = vunpack.c.h.b16 %v580
      %v584 = vpack.c.b16 %v582, %v582
      %v585 = vpack.c.b16 %v583, %v583
      %vm586 = vsmask.f32 4368
      %vm587 = vmor %vm570, %vm586
      %v589 = vshrl.u32 %v584, 16
      %v591 = vrot.slane %v589, 7
      %v592 = vshll.u32 %v584, 16
      %v594 = vor.u32 %v591, %v592
      %v595 = vrot.slane %v591, 4
      %v597 = vshrl.u32 %v585, 16
      %v599 = vrot.slane %v597, 7
      %v600 = vshll.u32 %v585, 16
      %v602 = vor.u32 %v599, %v600
      %v603 = vsel %vm587, %v595, %v602
      %v604 = vrot.slane %v599, 4
      %vm608 = vcmask 1043456
      %vm609 = vmand %vm608, %vm575
      %v610 = vld [vmem:[#allocation2] sm:$0xf]
      %v611 = vsel %vm609, %v594, %v610
      %612 = vst [vmem:[#allocation2] sm:$0xf] %v611
      %613 = vst [vmem:[#allocation2 + $0x4] sm:$0xf] %v603
      %v614 = vld [vmem:[#allocation2 + $0x8] sm:$0x1]
      %v615 = vsel %vm571, %v604, %v614
      %616 = vst [vmem:[#allocation2 + $0x8] sm:$0x1] %v615
      %v617 = vld [vmem:[%s4] sm:$0x1]
      %v618 = vld [vmem:[#allocation2] sm:$0xf]
      %v619 = vld [vmem:[#allocation2 + $0x4] sm:$0xf]
      %v620 = vld [vmem:[%s3] sm:$0xf]
      %v621 = vld [vmem:[%s3 + $0x4] sm:$0xf]
      %v622 = vld [vmem:[%s3 + $0x8] sm:$0xf]
      %v623 = vld [vmem:[%s3 + $0xc] sm:$0xf]
      %v624 = vld [vmem:[%s3 + $0x10] sm:$0xf]
      %v625 = vld [vmem:[%s3 + $0x14] sm:$0xf]
      %v626 = vld [vmem:[%s3 + $0x18] sm:$0xf]
      %v627 = vld [vmem:[%s3 + $0x1c] sm:$0xf]
      %v628 = vld [vmem:[%s3 + $0x20] sm:$0xf]
      %v629 = vld [vmem:[%s3 + $0x24] sm:$0xf]
      %v630 = vld [vmem:[%s3 + $0x28] sm:$0xf]
      %v631 = vld [vmem:[%s3 + $0x2c] sm:$0xf]
      %v632 = vld [vmem:[%s3 + $0x30] sm:$0xf]
      %v633 = vld [vmem:[%s3 + $0x34] sm:$0xf]
      %v634 = vld [vmem:[%s3 + $0x38] sm:$0xf]
      %v635 = vld [vmem:[%s3 + $0x3c] sm:$0xf]
      %v636 = vld [vmem:[#allocation2 + $0x8] sm:$0x1]
      %s637 = scalar_lea.vmem %s3, 64
      %v638 = vld [vmem:[%s637] sm:$0xf]
      %v639 = vld [vmem:[%s637 + $0x4] sm:$0xf]
      %v640 = vld [vmem:[%s637 + $0x8] sm:$0xf]
      %v641 = vld [vmem:[%s637 + $0xc] sm:$0xf]
      %v642 = vld [vmem:[%s637 + $0x10] sm:$0xf]
      %v643 = vld [vmem:[%s637 + $0x14] sm:$0xf]
      %v644 = vld [vmem:[%s637 + $0x18] sm:$0xf]
      %v645 = vld [vmem:[%s637 + $0x1c] sm:$0xf]
      %v646 = vld [vmem:[%s637 + $0x20] sm:$0xf]
      %v647 = vld [vmem:[%s637 + $0x24] sm:$0xf]
      %v648 = vld [vmem:[%s637 + $0x28] sm:$0xf]
      %v649 = vld [vmem:[%s637 + $0x2c] sm:$0xf]
      %v650 = vld [vmem:[%s637 + $0x30] sm:$0xf]
      %v651 = vld [vmem:[%s637 + $0x34] sm:$0xf]
      %v652 = vld [vmem:[%s637 + $0x38] sm:$0xf]
      %v653 = vld [vmem:[%s637 + $0x3c] sm:$0xf]
      %v657 = vunpack.c.l.b16 %v618
      %v658 = vunpack.c.l.b16 %v619
      %v659 = vunpack.c.l.b16 %v636
      %v660 = vpack.c.b16 %v658, %v657
      %v661 = vpack.c.b16 %v659, %v659
      %vm662 = vsmask.f32 7424
      %v664 = vshrl.u32 %v660, 16
      %v666 = vshll.u32 %v660, 16
      %v668 = vrot.slane %v666, 1
      %v669 = vor.u32 %v664, %v668
      %v671 = vshll.u32 %v661, 16
      %v673 = vrot.slane %v671, 1
      %v674 = vsel %vm662, %v669, %v673
      %v692 = vunpack.c.l.b16 %v638
      %v693 = vunpack.c.l.b16 %v639
      %v694 = vunpack.c.l.b16 %v640
      %v695 = vunpack.c.l.b16 %v641
      %v696 = vunpack.c.l.b16 %v642
      %v697 = vunpack.c.l.b16 %v643
      %v698 = vunpack.c.l.b16 %v644
      %v699 = vunpack.c.l.b16 %v645
      %v700 = vunpack.c.l.b16 %v646
      %v701 = vunpack.c.l.b16 %v647
      %v702 = vunpack.c.l.b16 %v648
      %v703 = vunpack.c.l.b16 %v649
      %v704 = vunpack.c.l.b16 %v650
      %v705 = vunpack.c.l.b16 %v651
      %v706 = vunpack.c.l.b16 %v652
      %v707 = vunpack.c.l.b16 %v653
      %v708 = vpack.c.b16 %v693, %v692
      %v709 = vpack.c.b16 %v695, %v694
      %v710 = vpack.c.b16 %v697, %v696
      %v711 = vpack.c.b16 %v699, %v698
      %v712 = vpack.c.b16 %v701, %v700
      %v713 = vpack.c.b16 %v703, %v702
      %v714 = vpack.c.b16 %v705, %v704
      %v715 = vpack.c.b16 %v707, %v706
      %724 = vmatprep.subr.bf16.mxu0 0
      %725 = vmatpush1.bf16.msra.mxu0 %v708
      %726 = vmatprep.subr.bf16.mxu0 0
      %727 = vmatpush1.bf16.msra.mxu0 %v709
      %728 = vmatprep.subr.bf16.mxu0 0
      %729 = vmatpush1.bf16.msra.mxu0 %v710
      %730 = vmatprep.subr.bf16.mxu0 0
      %731 = vmatpush1.bf16.msra.mxu0 %v711
      %732 = vmatprep.subr.bf16.mxu0 0
      %733 = vmatpush1.bf16.msra.mxu0 %v712
      %734 = vmatprep.subr.bf16.mxu0 0
      %735 = vmatpush1.bf16.msra.mxu0 %v713
      %736 = vmatprep.subr.bf16.mxu0 0
      %737 = vmatpush1.bf16.msra.mxu0 %v714
      %738 = vmatprep.subr.bf16.mxu0 0
      %739 = vmatpush1.bf16.msra.mxu0 %v715
      %740 = vmatprep.subr.bf16.mxu0 0
      %741 = vmatpush1.bf16.msra.mxu0 0
      %742 = vmatprep.subr.bf16.mxu0 0
      %743 = vmatpush1.bf16.msra.mxu0 0
      %744 = vmatprep.subr.bf16.mxu0 0
      %745 = vmatpush1.bf16.msra.mxu0 0
      %746 = vmatprep.subr.bf16.mxu0 0
      %747 = vmatpush1.bf16.msra.mxu0 0
      %748 = vmatprep.subr.bf16.mxu0 0
      %749 = vmatpush1.bf16.msra.mxu0 0
      %750 = vmatprep.subr.bf16.mxu0 0
      %751 = vmatpush1.bf16.msra.mxu0 0
      %752 = vmatprep.subr.bf16.mxu0 0
      %753 = vmatpush1.bf16.msra.mxu0 0
      %754 = vmatprep.subr.bf16.mxu0 0
      %755 = vmatpush1.bf16.msra.mxu0 0
      %756 = vmatprep.mubr.bf16.mxu0 0
      %757 = vmatmul.mubr.bf16.gmra.mrb[0].mxu0 %v674
      %v758 = vpop.f32.mrb[0].mxu0
      %v759 = vadd.f32 0.0, %v758
      %v760 = vpop.f32.mrb[0].mxu0
      %v761 = vpop.f32.mrb[0].mxu0
      %v762 = vadd.f32 0.0, %v761
      %v763 = vpop.f32.mrb[0].mxu0
      %764 = vdwg.mxu0
      %v782 = vunpack.c.l.b16 %v620
      %v783 = vunpack.c.l.b16 %v621
      %v784 = vunpack.c.l.b16 %v622
      %v785 = vunpack.c.l.b16 %v623
      %v786 = vunpack.c.l.b16 %v624
      %v787 = vunpack.c.l.b16 %v625
      %v788 = vunpack.c.l.b16 %v626
      %v789 = vunpack.c.l.b16 %v627
      %v790 = vunpack.c.l.b16 %v628
      %v791 = vunpack.c.l.b16 %v629
      %v792 = vunpack.c.l.b16 %v630
      %v793 = vunpack.c.l.b16 %v631
      %v794 = vunpack.c.l.b16 %v632
      %v795 = vunpack.c.l.b16 %v633
      %v796 = vunpack.c.l.b16 %v634
      %v797 = vunpack.c.l.b16 %v635
      %v798 = vpack.c.b16 %v783, %v782
      %v799 = vpack.c.b16 %v785, %v784
      %v800 = vpack.c.b16 %v787, %v786
      %v801 = vpack.c.b16 %v789, %v788
      %v802 = vpack.c.b16 %v791, %v790
      %v803 = vpack.c.b16 %v793, %v792
      %v804 = vpack.c.b16 %v795, %v794
      %v805 = vpack.c.b16 %v797, %v796
      %814 = vmatprep.subr.bf16.mxu0 0
      %815 = vmatpush1.bf16.msra.mxu0 %v798
      %816 = vmatprep.subr.bf16.mxu0 0
      %817 = vmatpush1.bf16.msra.mxu0 %v799
      %818 = vmatprep.subr.bf16.mxu0 0
      %819 = vmatpush1.bf16.msra.mxu0 %v800
      %820 = vmatprep.subr.bf16.mxu0 0
      %821 = vmatpush1.bf16.msra.mxu0 %v801
      %822 = vmatprep.subr.bf16.mxu0 0
      %823 = vmatpush1.bf16.msra.mxu0 %v802
      %824 = vmatprep.subr.bf16.mxu0 0
      %825 = vmatpush1.bf16.msra.mxu0 %v803
      %826 = vmatprep.subr.bf16.mxu0 0
      %827 = vmatpush1.bf16.msra.mxu0 %v804
      %828 = vmatprep.subr.bf16.mxu0 0
      %829 = vmatpush1.bf16.msra.mxu0 %v805
      %830 = vmatprep.subr.bf16.mxu0 0
      %831 = vmatpush1.bf16.msra.mxu0 0
      %832 = vmatprep.subr.bf16.mxu0 0
      %833 = vmatpush1.bf16.msra.mxu0 0
      %834 = vmatprep.subr.bf16.mxu0 0
      %835 = vmatpush1.bf16.msra.mxu0 0
      %836 = vmatprep.subr.bf16.mxu0 0
      %837 = vmatpush1.bf16.msra.mxu0 0
      %838 = vmatprep.subr.bf16.mxu0 0
      %839 = vmatpush1.bf16.msra.mxu0 0
      %840 = vmatprep.subr.bf16.mxu0 0
      %841 = vmatpush1.bf16.msra.mxu0 0
      %842 = vmatprep.subr.bf16.mxu0 0
      %843 = vmatpush1.bf16.msra.mxu0 0
      %844 = vmatprep.subr.bf16.mxu0 0
      %845 = vmatpush1.bf16.msra.mxu0 0
      %846 = vmatprep.mubr.bf16.mxu0 0
      %847 = vmatmul.mubr.bf16.gmra.mrb[0].mxu0 %v660
      %v848 = vpop.f32.mrb[0].mxu0
      %v849 = vadd.f32 %v759, %v848
      %v850 = vpop.f32.mrb[0].mxu0
      %v851 = vpop.f32.mrb[0].mxu0
      %v852 = vadd.f32 %v762, %v851
      %v853 = vpop.f32.mrb[0].mxu0
      %854 = vdwg.mxu0
      %v855 = vld [vmem:[#allocation2] sm:$0xe]
      %s856 = scalar_lea.vmem %s3, 128
      %v857 = vld [vmem:[%s856] sm:$0xf]
      %v858 = vld [vmem:[%s856 + $0x4] sm:$0xf]
      %v859 = vld [vmem:[%s856 + $0x8] sm:$0xf]
      %v860 = vld [vmem:[%s856 + $0xc] sm:$0xf]
      %v861 = vld [vmem:[%s856 + $0x10] sm:$0xf]
      %v862 = vld [vmem:[%s856 + $0x14] sm:$0xf]
      %v863 = vld [vmem:[%s856 + $0x18] sm:$0xf]
      %v864 = vld [vmem:[%s856 + $0x1c] sm:$0xf]
      %v865 = vld [vmem:[%s856 + $0x20] sm:$0xf]
      %v866 = vld [vmem:[%s856 + $0x24] sm:$0xf]
      %v867 = vld [vmem:[%s856 + $0x28] sm:$0xf]
      %v868 = vld [vmem:[%s856 + $0x2c] sm:$0xf]
      %v869 = vld [vmem:[%s856 + $0x30] sm:$0xf]
      %v870 = vld [vmem:[%s856 + $0x34] sm:$0xf]
      %v871 = vld [vmem:[%s856 + $0x38] sm:$0xf]
      %v872 = vld [vmem:[%s856 + $0x3c] sm:$0xf]
      %v874 = vunpack.c.l.b16 %v855
      %v875 = vpack.c.b16 %v658, %v874
      %vm876 = vcmask 1046528
      %v877 = vrot.slane %v875, 1
      %v878 = vrot.slane %v661, 1
      %v879 = vsel %vm876, %v877, %v878
      %v897 = vunpack.c.l.b16 %v857
      %v898 = vunpack.c.l.b16 %v858
      %v899 = vunpack.c.l.b16 %v859
      %v900 = vunpack.c.l.b16 %v860
      %v901 = vunpack.c.l.b16 %v861
      %v902 = vunpack.c.l.b16 %v862
      %v903 = vunpack.c.l.b16 %v863
      %v904 = vunpack.c.l.b16 %v864
      %v905 = vunpack.c.l.b16 %v865
      %v906 = vunpack.c.l.b16 %v866
      %v907 = vunpack.c.l.b16 %v867
      %v908 = vunpack.c.l.b16 %v868
      %v909 = vunpack.c.l.b16 %v869
      %v910 = vunpack.c.l.b16 %v870
      %v911 = vunpack.c.l.b16 %v871
      %v912 = vunpack.c.l.b16 %v872
      %v913 = vpack.c.b16 %v898, %v897
      %v914 = vpack.c.b16 %v900, %v899
      %v915 = vpack.c.b16 %v902, %v901
      %v916 = vpack.c.b16 %v904, %v903
      %v917 = vpack.c.b16 %v906, %v905
      %v918 = vpack.c.b16 %v908, %v907
      %v919 = vpack.c.b16 %v910, %v909
      %v920 = vpack.c.b16 %v912, %v911
      %929 = vmatprep.subr.bf16.mxu0 0
      %930 = vmatpush1.bf16.msra.mxu0 %v913
      %931 = vmatprep.subr.bf16.mxu0 0
      %932 = vmatpush1.bf16.msra.mxu0 %v914
      %933 = vmatprep.subr.bf16.mxu0 0
      %934 = vmatpush1.bf16.msra.mxu0 %v915
      %935 = vmatprep.subr.bf16.mxu0 0
      %936 = vmatpush1.bf16.msra.mxu0 %v916
      %937 = vmatprep.subr.bf16.mxu0 0
      %938 = vmatpush1.bf16.msra.mxu0 %v917
      %939 = vmatprep.subr.bf16.mxu0 0
      %940 = vmatpush1.bf16.msra.mxu0 %v918
      %941 = vmatprep.subr.bf16.mxu0 0
      %942 = vmatpush1.bf16.msra.mxu0 %v919
      %943 = vmatprep.subr.bf16.mxu0 0
      %944 = vmatpush1.bf16.msra.mxu0 %v920
      %945 = vmatprep.subr.bf16.mxu0 0
      %946 = vmatpush1.bf16.msra.mxu0 0
      %947 = vmatprep.subr.bf16.mxu0 0
      %948 = vmatpush1.bf16.msra.mxu0 0
      %949 = vmatprep.subr.bf16.mxu0 0
      %950 = vmatpush1.bf16.msra.mxu0 0
      %951 = vmatprep.subr.bf16.mxu0 0
      %952 = vmatpush1.bf16.msra.mxu0 0
      %953 = vmatprep.subr.bf16.mxu0 0
      %954 = vmatpush1.bf16.msra.mxu0 0
      %955 = vmatprep.subr.bf16.mxu0 0
      %956 = vmatpush1.bf16.msra.mxu0 0
      %957 = vmatprep.subr.bf16.mxu0 0
      %958 = vmatpush1.bf16.msra.mxu0 0
      %959 = vmatprep.subr.bf16.mxu0 0
      %960 = vmatpush1.bf16.msra.mxu0 0
      %961 = vmatprep.mubr.bf16.mxu0 0
      %962 = vmatmul.mubr.bf16.gmra.mrb[0].mxu0 %v879
      %v963 = vpop.f32.mrb[0].mxu0
      %v964 = vadd.f32 0.0, %v963
      %v965 = vpop.f32.mrb[0].mxu0
      %v966 = vpop.f32.mrb[0].mxu0
      %v967 = vadd.f32 0.0, %v966
      %v968 = vpop.f32.mrb[0].mxu0
      %969 = vdwg.mxu0
      %v970 = vadd.f32 %v849, %v964
      %v971 = vadd.f32 %v852, %v967
      %v973 = vlaneseq
      %v974 = vshrl.u32 %v973, 7
      %v975 = vsub.s32 0, %v974
      %v976 = vrot.slane %v617, %v975
      %v978 = vadd.f32 %v970, %v976
      %v979 = vadd.f32 %v971, %v976
      %vm980 = vcmp.ge.f32.partialorder %v978, 0.0
      %vm981 = vcmp.ge.f32.partialorder %v979, 0.0
      %v982 = vmul.f32 %v978, 0.2
      %v983 = vmul.f32 %v979, 0.2
      %v984 = vsel %vm980, %v978, %v982
      %v985 = vsel %vm981, %v979, %v983
      %986 = vst [vmem:[%s224] sm:$0xff] %v984
      %987 = vst [vmem:[%s224 + $0x8] sm:$0xff] %v985
      %p988 = scmp.lt.s32.totalorder %s16, 1
      %s989 = scalar_select %p988, %s16, 1
      %s990 = smul.addr %s989, 2
      %s991 = smul.addr %s990, 8
      %s992 = scalar_lea.vmem %s5, %s991
      // Predicated region
      $region41: #{convblock_forward.1} parent=39 // pred_check
        %p993 = pneg %p144
      $region42: #{convblock_forward.1} parent=39 // pred_check_branch
        %995 = sbr.rel (%p993) target = $region44
      $region43: #{convblock_forward.1} parent=39 // pred_region
        _
      $region44: #{convblock_forward.1} parent=39 // pred_fallthru
        _
    $region40: #{convblock_forward.1} parent=5 // pred_fallthru
      _
    %p996 = scmp.le.s32.totalorder 2, %s11
    // Predicated region
    $region45: #{convblock_forward.1} parent=5 // pred_check
      %p997 = pneg %p996
    $region46: #{convblock_forward.1} parent=5 // pred_check_branch
      %999 = sbr.rel (%p997) target = $region48
    $region47: #{convblock_forward.1} parent=5 // pred_region
      %s1000 = ssub.s32 %s11, 2
      // Predicated region
      $region49: #{convblock_forward.1} parent=47 // pred_check
        %p1001 = pneg %p150
      $region50: #{convblock_forward.1} parent=47 // pred_check_branch
        %1003 = sbr.rel (%p1001) target = $region52
      $region51: #{convblock_forward.1} parent=47 // pred_region
        %p1004 = scmp.lt.s32.totalorder %s17, 1
        %s1005 = scalar_select %p1004, %s17, 1
        %s1006 = smul.addr %s1005, 2
        %s1007 = smul.addr %s1006, 8
        %s1008 = scalar_lea.vmem %s5, %s1007
      $region52: #{convblock_forward.1} parent=47 // pred_fallthru
        _
    $region48: #{convblock_forward.1} parent=5 // pred_fallthru
      _
  $region6: #{convblock_forward.1} parent=0 // loop_footer
    %s15 = sadd.s32 1, %s11
  $region7: #{convblock_forward.1} parent=0 // loop_footer_branch
    %10 = sbr.rel target = $region3
  $region8: #{convblock_forward.1} parent=0 // loop_exit
    _

</llo_original>
